<compile_context>
chip_gen: v7x
topology: tpu7x:2x2x1
jax: 0.10.0
libtpu: 0.0.40
codegen_flags: <defaults>
</compile_context>

<pallas_src>
import jax
import jax.numpy as jnp
from jax.experimental import pallas as pl
from jax.experimental.pallas import tpu as pltpu


def _round_up(x: int, m: int) -> int:
    return ((x + m - 1) // m) * m


def _choose_tile_n(n_rows: int, requested: int = 512) -> int:
    """Row-tile size: multiple of 8 sublanes, and >= 2 grid steps when possible
    so the parallel axis can shard across v7x's two TensorCores."""
    half = _round_up(max(pl.cdiv(n_rows, 2), 1), 8)
    return max(8, min(requested, half))


def pca_forward_kernel(x_ref, p_ref, b_ref, out_ref):
    """out = x_tile @ P + b   (single MXU matmul, f32 accumulate, f32 bias add)."""
    acc = jnp.dot(x_ref[...], p_ref[...], preferred_element_type=jnp.float32)
    out_ref[...] = (acc + b_ref[...]).astype(out_ref.dtype)


def pca_precompute(mean, eigenvectors):
    """Once-per-fitted-model precompute (hoisted out of the forward hot path):
       P = V V^T,  b = mean (I - P)  so that  x @ P + b == (x - mean) V V^T + mean."""
    proj = (eigenvectors @ eigenvectors.T).astype(jnp.float32)    # (D, D)
    bias = (mean - mean @ proj).astype(jnp.float32)               # (D,)
    return proj, bias


def pca_autoencoder_forward(x, proj, bias, *, tile_n=512, use_bf16=False):
    """Pallas forward. x: (N, D), proj: (D, D), bias: (D,).
    Returns reconstruction (N, D) = x @ proj + bias  ==  (x - mean) V V^T + mean."""
    N, D = x.shape
    out_dtype = x.dtype

    compute_dtype = jnp.bfloat16 if use_bf16 else jnp.float32
    x_in = x.astype(compute_dtype)
    p_in = proj.astype(compute_dtype)
    b_in = bias.reshape(1, D).astype(jnp.float32)   # bias add stays in f32

    tile_n = _choose_tile_n(N, tile_n)
    grid = (pl.cdiv(N, tile_n),)                    # partial last tile handled by Pallas

    itemsize = jnp.dtype(compute_dtype).itemsize
    cost = pl.CostEstimate(
        flops=2 * N * D * D,
        transcendentals=0,
        bytes_accessed=int(
            N * D * itemsize                        # X read
            + D * D * itemsize                      # P read (once)
            + D * 4                                 # bias read
            + N * D * jnp.dtype(out_dtype).itemsize # output write
        ),
    )

    return pl.pallas_call(
        pca_forward_kernel,
        out_shape=jax.ShapeDtypeStruct((N, D), out_dtype),
        grid=grid,
        in_specs=[
            # X row tile: full feature dim (no HBM-side padding needed).
            pl.BlockSpec((tile_n, D), lambda i: (i, 0)),
            # P: grid-invariant, resident, single-buffered.
            pl.BlockSpec((D, D), lambda i: (0, 0), pipeline_mode=pl.Buffered(1)),
            # bias: grid-invariant, resident, single-buffered.
            pl.BlockSpec((1, D), lambda i: (0, 0), pipeline_mode=pl.Buffered(1)),
        ],
        out_specs=pl.BlockSpec((tile_n, D), lambda i: (i, 0)),
        compiler_params=pltpu.CompilerParams(
            dimension_semantics=("parallel",),       # independent row tiles
            vmem_limit_bytes=64 * 1024 * 1024,       # avoid v5e's 16 MiB default ceiling
        ),
        cost_estimate=cost,
    )(x_in, p_in, b_in)


def pca_fit(x, output_dim):
    """Plain-JAX glue equivalent to PcaAutoencoder.fit (runs outside the kernel)."""
    mean = jnp.mean(x, axis=0)
    x_centered = x - mean
    cov = (x_centered.T @ x_centered) / (x.shape[0] - 1)
    # covariance is symmetric -> eigh gives real eigenpairs (matches torch.real path)
    eigenvalues, eigenvectors = jnp.linalg.eigh(cov)
    idx = jnp.argsort(eigenvalues)[::-1]             # descending
    eigenvectors = eigenvectors[:, idx][:, :output_dim]
    return mean, eigenvectors


def reference_forward(x, mean, eigenvectors):
    """Two-matmul reference identical in structure to the PyTorch module."""
    xc = x - mean
    z = xc @ eigenvectors
    return z @ eigenvectors.T + mean


if __name__ == "__main__":
    key = jax.random.PRNGKey(0)
    N, input_dim, output_dim = 16, 32, 8

    x = jax.random.normal(key, (N, input_dim), dtype=jnp.float32)

    # "fit" + projection precompute: once per model, NOT in the per-call forward.
    mean, eigenvectors = pca_fit(x, output_dim)
    proj, bias = pca_precompute(mean, eigenvectors)

    out = pca_autoencoder_forward(x, proj, bias)
    out = jax.block_until_ready(out)

    ref = reference_forward(x, mean, eigenvectors)
    assert out.shape == (N, input_dim)
    assert jnp.allclose(out, ref, atol=1e-4, rtol=1e-4), "mismatch vs reference"

    print("KERNEL_OK")
</pallas_src>

<mosaic_0001>
module attributes {stable_mosaic.version = 11 : i64} {
  func.func @pca_forward_kernel(%arg0: i32, %arg1: memref<8x32xf32, #tpu.memory_space<vmem>>, %arg2: memref<32x32xf32, #tpu.memory_space<vmem>>, %arg3: memref<1x32xf32, #tpu.memory_space<vmem>>, %arg4: memref<8x32xf32, #tpu.memory_space<vmem>>) attributes {dimension_semantics = [#tpu.dimension_semantics<parallel>], iteration_bounds = array<i64: 2>, scalar_prefetch = 0 : i64, scratch_operands = 0 : i64, tpu.core_type = #tpu.core_type<tc>, window_params = [{transform_indices = @transform_0, window_bounds = array<i64: 8, 32>}, {pipeline_mode = #tpu.pipeline_mode<synchronous>, transform_indices = @transform_1, window_bounds = array<i64: 32, 32>}, {pipeline_mode = #tpu.pipeline_mode<synchronous>, transform_indices = @transform_2, window_bounds = array<i64: 1, 32>}, {transform_indices = @transform_3, window_bounds = array<i64: 8, 32>}]} {
    %c0 = arith.constant 0 : index
    %c0_0 = arith.constant 0 : index
    %0 = vector.load %arg1[%c0, %c0_0] : memref<8x32xf32, #tpu.memory_space<vmem>>, vector<8x32xf32>
    %c0_1 = arith.constant 0 : index
    %c0_2 = arith.constant 0 : index
    %1 = vector.load %arg2[%c0_1, %c0_2] : memref<32x32xf32, #tpu.memory_space<vmem>>, vector<32x32xf32>
    %cst = arith.constant dense<0.000000e+00> : vector<8x32xf32>
    %2 = tpu.matmul %0, %1, %cst {dimension_numbers = #tpu.dot_dimension_numbers<[1], [0], [0], [1], [0, 0, 1, 1], [], []>} : vector<8x32xf32>, vector<32x32xf32>, vector<8x32xf32> -> vector<8x32xf32>
    %c0_3 = arith.constant 0 : index
    %c0_4 = arith.constant 0 : index
    %3 = vector.load %arg3[%c0_3, %c0_4] : memref<1x32xf32, #tpu.memory_space<vmem>>, vector<1x32xf32>
    %4 = vector.broadcast %3 : vector<1x32xf32> to vector<8x32xf32>
    %5 = arith.addf %2, %4 : vector<8x32xf32>
    %c0_5 = arith.constant 0 : index
    %c0_6 = arith.constant 0 : index
    %6 = vector.load %arg4[%c0_5, %c0_6] : memref<8x32xf32, #tpu.memory_space<vmem>>, vector<8x32xf32>
    tpu.vector_store %arg4[%c0_5, %c0_6], %5 {strides = array<i32>} : memref<8x32xf32, #tpu.memory_space<vmem>>, vector<8x32xf32>,
    return
  }
  func.func @transform_0(%arg0: i32) -> (i32, i32) {
    %c0_i32 = arith.constant 0 : i32
    %c0_i32_0 = arith.constant 0 : i32
    return %arg0, %c0_i32 : i32, i32
  }
  func.func @transform_1(%arg0: i32) -> (i32, i32) {
    %c0_i32 = arith.constant 0 : i32
    %c0_i32_0 = arith.constant 0 : i32
    %c0_i32_1 = arith.constant 0 : i32
    return %c0_i32, %c0_i32_0 : i32, i32
  }
  func.func @transform_2(%arg0: i32) -> (i32, i32) {
    %c0_i32 = arith.constant 0 : i32
    %c0_i32_0 = arith.constant 0 : i32
    %c0_i32_1 = arith.constant 0 : i32
    return %c0_i32, %c0_i32_0 : i32, i32
  }
  func.func @transform_3(%arg0: i32) -> (i32, i32) {
    %c0_i32 = arith.constant 0 : i32
    %c0_i32_0 = arith.constant 0 : i32
    return %arg0, %c0_i32 : i32, i32
  }
}

</mosaic_0001>

<llo_original>
// kernel: tpu_custom_call.1
$region0: #{tpu_custom_call.1}
  #allocation0 [shape = 'u32[]', space=smem, size = 0x4, offset = 0x4, fixed_abs, tag = 'smem constant byte address 0x4 - core index']
  #allocation1 [shape = 'u32[144,128]{1,0:T(1,128)}', space=vmem, size = 0x12000, scoped, tag = 'internal scratch']
  %s0 = inlined_call_operand.hbm [shape: f32[16,32], index: 0, kind: input, shape index: {}]
  %s1 = inlined_call_operand.hbm [shape: f32[32,32], index: 1, kind: input, shape index: {}]
  %s2 = inlined_call_operand.hbm [shape: f32[1,32], index: 2, kind: input, shape index: {}]
  %s3 = inlined_call_operand.hbm [shape: f32[16,32], index: 3, kind: output, shape index: {}]
  %s4 = sld [smem:[#allocation0]]
  $region57: #{tpu_custom_call.1} parent=0
    _
  %s6 = ssub.s32 1, %s4
  %s7 = scalar_select 0, %s6, %s4
  $region1: #{tpu_custom_call.1} parent=0
    #allocation2 [shape = 'u8[8192]{0}', space=vmem, size = 0x2000, scoped, tag = 'input window, operand 0']
    #allocation3 [shape = 's32[2]{0}', space=sflag, size = 0x8, scoped, tag = 'scoped memory for tpu_custom_call.1']
    #allocation4 [shape = 's32[2]{0}', space=sflag, size = 0x8, scoped, tag = 'scoped memory for tpu_custom_call.1']
    #allocation5 [shape = 'u8[16384]{0}', space=vmem, size = 0x4000, scoped, tag = 'input window, operand 1, single buffered']
    #allocation6 [shape = 's32[1]{0}', space=sflag, size = 0x4, scoped, tag = 'scoped memory for tpu_custom_call.1']
    #allocation7 [shape = 'u8[512]{0}', space=vmem, size = 0x400, scoped, tag = 'input window, operand 2, single buffered']
    #allocation8 [shape = 'u8[8192]{0}', space=vmem, size = 0x2000, scoped, tag = 'output window, operand 0']
    %8 = vsyncpa [#allocation3], 0
    %s9 = scalar_lea.sflag [#allocation3], 1
    %10 = vsyncpa %s9, 0
    %11 = vsyncpa [#allocation6], 0
    %12 = vsyncpa [#allocation4], 0
    %s13 = scalar_lea.sflag [#allocation4], 1
    %14 = vsyncpa %s13, 0
    loop: start=0, step=1, limit=4
    $region2: #{tpu_custom_call.1} parent=1 // loop_pre_header
      _
    $region3: #{tpu_custom_call.1} parent=1 // loop_header
      %s16 = sphi 0, %s20
      %p17 = scmp.ge.s32.totalorder %s16, 4
      %s26 = sphi 0, %s28
      %s29 = sphi 0, %s26
      %s30 = sphi 0, %s29
      %s46 = sphi 0, %s30
      %s50 = sphi 0, %s50
      %s52 = sphi 0, %s50
      %s53 = sphi 0, %s52
      %s67 = sphi 0, %s53
      %s71 = sphi 0, %s71
      %s73 = sphi 0, %s71
      %s74 = sphi 0, %s73
      %s88 = sphi 0, %s74
      %s94 = sphi 0, %s96
      %s97 = sphi 0, %s94
      %s98 = sphi 0, %s97
      %s114 = sphi 0, %s98
    $region4: #{tpu_custom_call.1} parent=1 // loop_header_branch
      %19 = sbr.rel (%p17) target = $region8
    $region5: #{tpu_custom_call.1} parent=1 // loop_body
      %s21 = ssub.s32 %s16, 1
      %s22 = ssub.s32 %s16, 2
      %s23 = sadd.s32 %s16, 1
      %s24 = ssub.s32 %s16, %s23
      %p25 = scmp.eq.s32.totalorder %s24, 0
      %s27 = sadd.s32 %s26, 1
      %s28 = scalar_select %p25, %s26, %s27
      %p31 = pneg %p25
      %p32 = scmp.eq.s32.totalorder %s16, 1
      %p33 = por %p31, %p32
      %p34 = scmp.ne.s32.totalorder %s26, %s29
      %p35 = scmp.eq.s32.totalorder %s16, 0
      %p36 = por %p34, %p35
      %p37 = scmp.ne.s32.totalorder %s26, %s29
      %p38 = scmp.eq.s32.totalorder %s21, 1
      %p39 = por %p37, %p38
      %p40 = scmp.ne.s32.totalorder %s29, %s30
      %p41 = scmp.eq.s32.totalorder %s21, 0
      %p42 = por %p40, %p41
      %p43 = scmp.ne.s32.totalorder %s29, %s30
      %p44 = scmp.eq.s32.totalorder %s22, 1
      %p45 = por %p43, %p44
      %p47 = scmp.ne.s32.totalorder %s30, %s46
      %p48 = scmp.eq.s32.totalorder %s22, 0
      %p49 = por %p47, %p48
      %s51 = sadd.s32 %s50, 1
      %p54 = scmp.eq.s32.totalorder %s16, 1
      %p55 = scmp.ne.s32.totalorder %s50, %s52
      %p56 = scmp.eq.s32.totalorder %s16, 0
      %p57 = por %p55, %p56
      %p58 = scmp.ne.s32.totalorder %s50, %s52
      %p59 = scmp.eq.s32.totalorder %s21, 1
      %p60 = por %p58, %p59
      %p61 = scmp.ne.s32.totalorder %s52, %s53
      %p62 = scmp.eq.s32.totalorder %s21, 0
      %p63 = por %p61, %p62
      %p64 = scmp.ne.s32.totalorder %s52, %s53
      %p65 = scmp.eq.s32.totalorder %s22, 1
      %p66 = por %p64, %p65
      %p68 = scmp.ne.s32.totalorder %s53, %s67
      %p69 = scmp.eq.s32.totalorder %s22, 0
      %p70 = por %p68, %p69
      %s72 = sadd.s32 %s71, 1
      %p75 = scmp.eq.s32.totalorder %s16, 1
      %p76 = scmp.ne.s32.totalorder %s71, %s73
      %p77 = scmp.eq.s32.totalorder %s16, 0
      %p78 = por %p76, %p77
      %p79 = scmp.ne.s32.totalorder %s71, %s73
      %p80 = scmp.eq.s32.totalorder %s21, 1
      %p81 = por %p79, %p80
      %p82 = scmp.ne.s32.totalorder %s73, %s74
      %p83 = scmp.eq.s32.totalorder %s21, 0
      %p84 = por %p82, %p83
      %p85 = scmp.ne.s32.totalorder %s73, %s74
      %p86 = scmp.eq.s32.totalorder %s22, 1
      %p87 = por %p85, %p86
      %p89 = scmp.ne.s32.totalorder %s74, %s88
      %p90 = scmp.eq.s32.totalorder %s22, 0
      %p91 = por %p89, %p90
      %s92 = ssub.s32 %s16, %s23
      %p93 = scmp.eq.s32.totalorder %s92, 0
      %s95 = sadd.s32 %s94, 1
      %s96 = scalar_select %p93, %s94, %s95
      %p99 = pneg %p93
      %p100 = scmp.eq.s32.totalorder %s16, 1
      %p101 = por %p99, %p100
      %p102 = scmp.ne.s32.totalorder %s94, %s97
      %p103 = scmp.eq.s32.totalorder %s16, 0
      %p104 = por %p102, %p103
      %p105 = scmp.ne.s32.totalorder %s94, %s97
      %p106 = scmp.eq.s32.totalorder %s21, 1
      %p107 = por %p105, %p106
      %p108 = scmp.ne.s32.totalorder %s97, %s98
      %p109 = scmp.eq.s32.totalorder %s21, 0
      %p110 = por %p108, %p109
      %p111 = scmp.ne.s32.totalorder %s97, %s98
      %p112 = scmp.eq.s32.totalorder %s22, 1
      %p113 = por %p111, %p112
      %p115 = scmp.ne.s32.totalorder %s98, %s114
      %p116 = scmp.eq.s32.totalorder %s22, 0
      %p117 = por %p115, %p116
      %p118 = scmp.le.s32.totalorder 1, %s16
      %p119 = scmp.lt.s32.totalorder %s16, 3
      %p120 = pnand %p118, %p119
      %p121 = pneg %p120
      // Predicated region
      $region9: #{tpu_custom_call.1} parent=5 // pred_check
        _
      $region10: #{tpu_custom_call.1} parent=5 // pred_check_branch
        %123 = sbr.rel (%p120) target = $region12
      $region11: #{tpu_custom_call.1} parent=5 // pred_region
        %s124 = ssub.s32 %s16, 1
        // Predicated region
        $region13: #{tpu_custom_call.1} parent=11 // pred_check
          %p125 = pneg %p63
        $region14: #{tpu_custom_call.1} parent=11 // pred_check_branch
          %127 = sbr.rel (%p125) target = $region16
        $region15: #{tpu_custom_call.1} parent=11 // pred_region
          %s129 = ssub.s32 512, 512
          %130 = vsyncadd [#allocation6], %s129
          %s131 = sshll.u32 [#allocation5], 4
          %s132 = int_to_ptr.vmem [resolvable:$true] %s131
          %137 = dma.hbm_to_vmem [thread:$0]  %s1, 512, %s132, [#allocation6], 128, 128, 8
        $region16: #{tpu_custom_call.1} parent=11 // pred_fallthru
          _
        // Predicated region
        $region17: #{tpu_custom_call.1} parent=11 // pred_check
          %p138 = pneg %p84
        $region18: #{tpu_custom_call.1} parent=11 // pred_check_branch
          %140 = sbr.rel (%p138) target = $region20
        $region19: #{tpu_custom_call.1} parent=11 // pred_region
          %s142 = ssub.s32 16, 16
          %143 = vsyncadd [#allocation6], %s142
          %s145 = sshll.u32 [#allocation7], 4
          %s146 = int_to_ptr.vmem [resolvable:$true] %s145
          %148 = dma.hbm_to_vmem [thread:$0]  %s2, 16, %s146, [#allocation6]
        $region20: #{tpu_custom_call.1} parent=11 // pred_fallthru
          _
      $region12: #{tpu_custom_call.1} parent=5 // pred_fallthru
        _
      %p149 = scmp.lt.s32.totalorder %s16, 2
      // Predicated region
      $region21: #{tpu_custom_call.1} parent=5 // pred_check
        %p150 = pneg %p149
      $region22: #{tpu_custom_call.1} parent=5 // pred_check_branch
        %152 = sbr.rel (%p150) target = $region24
      $region23: #{tpu_custom_call.1} parent=5 // pred_region
        // Predicated region
        $region25: #{tpu_custom_call.1} parent=23 // pred_check
          %p153 = pneg %p36
        $region26: #{tpu_custom_call.1} parent=23 // pred_check_branch
          %155 = sbr.rel (%p153) target = $region28
        $region27: #{tpu_custom_call.1} parent=23 // pred_region
          %s156 = sand.u32 %s26, 1
          %s157 = scalar_lea.sflag [#allocation3], %s156
          %s158 = sand.u32 %s26, 1
          %s159 = smul.addr %s158, 8
          %s160 = scalar_lea.vmem [#allocation2], %s159
          %s162 = ssub.s32 128, 128
          %163 = vsyncadd %s157, %s162
          %s164 = smul.addr %s16, 128
          %s165 = scalar_lea.hbm %s0, %s164
          %s167 = sshll.u32 %s160, 4
          %s168 = int_to_ptr.vmem [resolvable:$true] %s167
          %170 = dma.hbm_to_vmem [thread:$0]  %s165, 128, %s168, %s157
        $region28: #{tpu_custom_call.1} parent=23 // pred_fallthru
          _
      $region24: #{tpu_custom_call.1} parent=5 // pred_fallthru
        _
      %p171 = scmp.le.s32.totalorder 1, %s16
      %p172 = scmp.lt.s32.totalorder %s16, 3
      %p173 = pnand %p171, %p172
      %p174 = pneg %p173
      // Predicated region
      $region29: #{tpu_custom_call.1} parent=5 // pred_check
        _
      $region30: #{tpu_custom_call.1} parent=5 // pred_check_branch
        %176 = sbr.rel (%p173) target = $region32
      $region31: #{tpu_custom_call.1} parent=5 // pred_region
        %s177 = ssub.s32 %s16, 1
        %s178 = sand.u32 %s29, 1
        %s179 = scalar_lea.sflag [#allocation3], %s178
        %s180 = sand.u32 %s29, 1
        %s181 = smul.addr %s180, 8
        %s182 = scalar_lea.vmem [#allocation2], %s181
        // Predicated region
        $region33: #{tpu_custom_call.1} parent=31 // pred_check
          %p183 = pneg %p42
        $region34: #{tpu_custom_call.1} parent=31 // pred_check_branch
          %185 = sbr.rel (%p183) target = $region36
        $region35: #{tpu_custom_call.1} parent=31 // pred_region
          %186 = dma.done %s179, 128
        $region36: #{tpu_custom_call.1} parent=31 // pred_fallthru
          _
        // Predicated region
        $region37: #{tpu_custom_call.1} parent=31 // pred_check
          %p187 = pneg %p63
        $region38: #{tpu_custom_call.1} parent=31 // pred_check_branch
          %189 = sbr.rel (%p187) target = $region40
        $region39: #{tpu_custom_call.1} parent=31 // pred_region
          %190 = dma.done [#allocation6], 512
        $region40: #{tpu_custom_call.1} parent=31 // pred_fallthru
          _
        // Predicated region
        $region41: #{tpu_custom_call.1} parent=31 // pred_check
          %p191 = pneg %p84
        $region42: #{tpu_custom_call.1} parent=31 // pred_check_branch
          %193 = sbr.rel (%p191) target = $region44
        $region43: #{tpu_custom_call.1} parent=31 // pred_region
          %194 = dma.done [#allocation6], 16
        $region44: #{tpu_custom_call.1} parent=31 // pred_fallthru
          _
        %s195 = sand.u32 %s29, 1
        %s196 = scalar_lea.sflag [#allocation3], %s195
        %s197 = sand.u32 %s29, 1
        %s198 = smul.addr %s197, 8
        %s199 = scalar_lea.vmem [#allocation2], %s198
        %p200 = pneg %p42
        %p201 = pneg %p39
        %p202 = pneg %p63
        %p203 = pneg %p60
        %p204 = pneg %p84
        %p205 = pneg %p81
        %p206 = pneg %p110
        %p207 = pneg %p107
        %s208 = sand.u32 %s97, 1
        %s209 = scalar_lea.sflag [#allocation4], %s208
        %s210 = sand.u32 %s97, 1
        %s211 = smul.addr %s210, 8
        %s212 = scalar_lea.vmem [#allocation8], %s211
        %v213 = vld [vmem:[%s182] sm:$0xff]
        %v214 = vld [vmem:[#allocation5] sm:$0xff]
        %v215 = vld [vmem:[#allocation5 + $0x8] sm:$0xff]
        %v216 = vld [vmem:[#allocation5 + $0x10] sm:$0xff]
        %v217 = vld [vmem:[#allocation5 + $0x18] sm:$0xff]
        %v218 = vld [vmem:[#allocation7] sm:$0x1]
        %v220 = vlaneseq
        %v221 = vshrl.u32 %v220, 7
        %v222 = vsub.s32 0, %v221
        %v223 = vrot.slane %v218, %v222
        %vm225 = vcmask 261120
        %v227 = vsel %vm225, %v213, 0
        %229 = vmatprep.subr.mxu0 0.0
        %230 = vmatpush1.msra.mxu0 %v214
        %231 = vmatprep.subr.mxu0 0.0
        %232 = vmatpush1.msra.mxu0 %v215
        %233 = vmatprep.subr.mxu0 0.0
        %234 = vmatpush1.msra.mxu0 %v216
        %235 = vmatprep.subr.mxu0 0.0
        %236 = vmatpush1.msra.mxu0 %v217
        %237 = vmatprep.subr.mxu0 0.0
        %238 = vmatpush1.msra.mxu0 0.0
        %239 = vmatprep.subr.mxu0 0.0
        %240 = vmatpush1.msra.mxu0 0.0
        %241 = vmatprep.subr.mxu0 0.0
        %242 = vmatpush1.msra.mxu0 0.0
        %243 = vmatprep.subr.mxu0 0.0
        %244 = vmatpush1.msra.mxu0 0.0
        %245 = vmatprep.subr.mxu0 0.0
        %246 = vmatpush1.msra.mxu0 0.0
        %247 = vmatprep.subr.mxu0 0.0
        %248 = vmatpush1.msra.mxu0 0.0
        %249 = vmatprep.subr.mxu0 0.0
        %250 = vmatpush1.msra.mxu0 0.0
        %251 = vmatprep.subr.mxu0 0.0
        %252 = vmatpush1.msra.mxu0 0.0
        %253 = vmatprep.subr.mxu0 0.0
        %254 = vmatpush1.msra.mxu0 0.0
        %255 = vmatprep.subr.mxu0 0.0
        %256 = vmatpush1.msra.mxu0 0.0
        %257 = vmatprep.subr.mxu0 0.0
        %258 = vmatpush1.msra.mxu0 0.0
        %259 = vmatprep.subr.mxu0 0.0
        %260 = vmatpush1.msra.mxu0 0.0
        %261 = vmatprep.subr.mxu0 0.0
        %262 = vmatpush1.msra.mxu0 0.0
        %263 = vmatprep.subr.mxu0 0.0
        %264 = vmatpush1.msra.mxu0 0.0
        %265 = vmatprep.subr.mxu0 0.0
        %266 = vmatpush1.msra.mxu0 0.0
        %267 = vmatprep.subr.mxu0 0.0
        %268 = vmatpush1.msra.mxu0 0.0
        %269 = vmatprep.subr.mxu0 0.0
        %270 = vmatpush1.msra.mxu0 0.0
        %271 = vmatprep.subr.mxu0 0.0
        %272 = vmatpush1.msra.mxu0 0.0
        %273 = vmatprep.subr.mxu0 0.0
        %274 = vmatpush1.msra.mxu0 0.0
        %275 = vmatprep.subr.mxu0 0.0
        %276 = vmatpush1.msra.mxu0 0.0
        %277 = vmatprep.subr.mxu0 0.0
        %278 = vmatpush1.msra.mxu0 0.0
        %279 = vmatprep.subr.mxu0 0.0
        %280 = vmatpush1.msra.mxu0 0.0
        %281 = vmatprep.subr.mxu0 0.0
        %282 = vmatpush1.msra.mxu0 0.0
        %283 = vmatprep.subr.mxu0 0.0
        %284 = vmatpush1.msra.mxu0 0.0
        %285 = vmatprep.subr.mxu0 0.0
        %286 = vmatpush1.msra.mxu0 0.0
        %287 = vmatprep.subr.mxu0 0.0
        %288 = vmatpush1.msra.mxu0 0.0
        %289 = vmatprep.subr.mxu0 0.0
        %290 = vmatpush1.msra.mxu0 0.0
        %291 = vmatprep.subr.mxu0 0.0
        %292 = vmatpush1.msra.mxu0 0.0
        %293 = vmatprep.mubr.f32.mxu0 0.0
        %294 = vmatmul.mubr.f32.gmra.mrb[0].mxu0 %v227
        %v295 = vpop.f32.mrb[0].mxu0
        %v296 = vadd.f32 %v223, %v295
        %v297 = vpop.f32.mrb[0].mxu0
        %298 = vdwg.mxu0
        %299 = vst.msk [vmem:[%s212] sm:$0xff] %vm225, %v296
        %s300 = sand.u32 %s97, 1
        %s301 = scalar_lea.sflag [#allocation4], %s300
        %s302 = sand.u32 %s97, 1
        %s303 = smul.addr %s302, 8
        %s304 = scalar_lea.vmem [#allocation8], %s303
        // Predicated region
        $region45: #{tpu_custom_call.1} parent=31 // pred_check
          %p305 = pneg %p107
        $region46: #{tpu_custom_call.1} parent=31 // pred_check_branch
          %307 = sbr.rel (%p305) target = $region48
        $region47: #{tpu_custom_call.1} parent=31 // pred_region
          %s309 = ssub.s32 128, 128
          %310 = vsyncadd %s301, %s309
          %s311 = smul.addr %s21, 128
          %s312 = scalar_lea.hbm %s3, %s311
          %s314 = sshll.u32 %s304, 4
          %s315 = int_to_ptr.vmem [resolvable:$true] %s314
          %317 = dma.vmem_to_hbm [thread:$0]  %s315, 128, %s312, %s301
        $region48: #{tpu_custom_call.1} parent=31 // pred_fallthru
          _
      $region32: #{tpu_custom_call.1} parent=5 // pred_fallthru
        _
      %p318 = scmp.le.s32.totalorder 2, %s16
      // Predicated region
      $region49: #{tpu_custom_call.1} parent=5 // pred_check
        %p319 = pneg %p318
      $region50: #{tpu_custom_call.1} parent=5 // pred_check_branch
        %321 = sbr.rel (%p319) target = $region52
      $region51: #{tpu_custom_call.1} parent=5 // pred_region
        %s322 = ssub.s32 %s16, 2
        // Predicated region
        $region53: #{tpu_custom_call.1} parent=51 // pred_check
          %p323 = pneg %p113
        $region54: #{tpu_custom_call.1} parent=51 // pred_check_branch
          %325 = sbr.rel (%p323) target = $region56
        $region55: #{tpu_custom_call.1} parent=51 // pred_region
          %s326 = sand.u32 %s98, 1
          %s327 = scalar_lea.sflag [#allocation4], %s326
          %s328 = sand.u32 %s98, 1
          %s329 = smul.addr %s328, 8
          %s330 = scalar_lea.vmem [#allocation8], %s329
          %331 = dma.done %s327, 128
        $region56: #{tpu_custom_call.1} parent=51 // pred_fallthru
          _
      $region52: #{tpu_custom_call.1} parent=5 // pred_fallthru
        _
    $region6: #{tpu_custom_call.1} parent=1 // loop_footer
      %s20 = sadd.s32 1, %s16
    $region7: #{tpu_custom_call.1} parent=1 // loop_footer_branch
      %15 = sbr.rel target = $region3
    $region8: #{tpu_custom_call.1} parent=1 // loop_exit
      _
    %332 = vsyncpa [#allocation3], 1
    %s333 = scalar_lea.sflag [#allocation3], 1
    %334 = vsyncpa %s333, 1
    %335 = vsyncpa [#allocation6], 1
    %336 = vsyncpa [#allocation4], 1
    %s337 = scalar_lea.sflag [#allocation4], 1
    %338 = vsyncpa %s337, 1

</llo_original>
